<compile_context>
chip_gen: v7x
topology: tpu7x:2x2x1
jax: 0.10.0
libtpu: 0.0.40
codegen_flags: <defaults>
</compile_context>

<pallas_src>
import jax
import jax.numpy as jnp
from jax.experimental import pallas as pl
from jax.experimental.pallas import tpu as pltpu


def _round_up(x, m):
    return ((x + m - 1) // m) * m


def _concat_pool_kernel(x_ref, out_ref):
    # x_ref: (tile_r, hw) tile in VMEM; reduce over the last (lane) axis.
    x = x_ref[...]
    hw = x.shape[-1]
    # Max in the input dtype (matches PyTorch AdaptiveMaxPool2d).
    mx = jnp.max(x, axis=-1, keepdims=True)
    # Mean accumulated in f32 (no whole-tile upcast materialized), cast back.
    s = jnp.sum(x, axis=-1, keepdims=True, dtype=jnp.float32)
    avg = (s * (1.0 / hw)).astype(out_ref.dtype)
    out_ref[:, 0:1] = mx.astype(out_ref.dtype)
    out_ref[:, 1:2] = avg


def _pick_tile_r(rows, hw, dtype_bytes):
    """Largest row tile whose double-buffered input footprint stays small.

    footprint ~= 2 * TILE_R * round_up(hw, 128) * dtype_bytes  (input is the
    only big buffer; outputs are (TILE_R, 2)).  Target <= ~16 MiB so it fits
    comfortably under a 48 MiB scoped-VMEM limit on every TPU generation
    (v7x has only 64 MiB physical VMEM).
    """
    hw_padded = _round_up(hw, 128)
    budget_per_buffer = 8 * 1024 * 1024  # 8 MiB per buffer -> 16 MiB double-buffered
    max_tile = budget_per_buffer // (hw_padded * dtype_bytes)
    max_tile = max(8, (max_tile // 8) * 8)  # sublane-aligned, floor at 8 rows
    if rows <= max_tile:
        return rows  # single block equal to the full dim is always legal
    return max_tile
    # TODO(synk): if H*W ever gets so large that even an 8-row tile exceeds the
    # VMEM budget, add a second "arbitrary" grid axis over hw with running
    # max/sum scratch and -inf/0 masking of the padded lane tail.


def adaptive_concat_pool2d(x):
    """x: (N, C, H, W) -> (N, 2*C, 1, 1), matching torch.cat([maxpool, avgpool], 1)."""
    N, C, H, W = x.shape
    rows = N * C
    hw = H * W
    x2d = x.reshape(rows, hw)

    dtype_bytes = jnp.dtype(x.dtype).itemsize
    tile_r = _pick_tile_r(rows, hw, dtype_bytes)
    grid = (pl.cdiv(rows, tile_r),)

    out2 = pl.pallas_call(
        _concat_pool_kernel,
        out_shape=jax.ShapeDtypeStruct((rows, 2), x.dtype),
        grid=grid,
        in_specs=[pl.BlockSpec((tile_r, hw), lambda i: (i, 0))],
        out_specs=pl.BlockSpec((tile_r, 2), lambda i: (i, 0)),
        compiler_params=pltpu.CompilerParams(
            dimension_semantics=("parallel",),  # shards row tiles across v7x's 2 TCs
            vmem_limit_bytes=48 * 1024 * 1024,  # > v5e's 16 MiB default, < v7x's 64 MiB physical
        ),
    )(x2d)

    mp = out2[:, 0].reshape(N, C, 1, 1)
    ap = out2[:, 1].reshape(N, C, 1, 1)
    return jnp.concatenate([mp, ap], axis=1)


if __name__ == "__main__":
    key = jax.random.PRNGKey(0)
    N, C, H, W = 2, 4, 16, 16
    x = jax.random.normal(key, (N, C, H, W), dtype=jnp.float32)

    out = adaptive_concat_pool2d(x)
    out = jax.block_until_ready(out)

    # reference check in plain JAX
    ref_max = jnp.max(x, axis=(2, 3), keepdims=True)
    ref_avg = jnp.mean(x, axis=(2, 3), keepdims=True)
    ref = jnp.concatenate([ref_max, ref_avg], axis=1)

    assert out.shape == (N, 2 * C, 1, 1), out.shape
    assert jnp.allclose(out, ref, atol=1e-5, rtol=1e-5), "mismatch vs reference"

    print("KERNEL_OK")
</pallas_src>

<mosaic_0001>
module attributes {stable_mosaic.version = 11 : i64} {
  func.func @_concat_pool_kernel(%arg0: i32, %arg1: memref<8x256xf32, #tpu.memory_space<vmem>>, %arg2: memref<8x2xf32, #tpu.memory_space<vmem>>) attributes {dimension_semantics = [#tpu.dimension_semantics<parallel>], iteration_bounds = array<i64: 1>, scalar_prefetch = 0 : i64, scratch_operands = 0 : i64, tpu.core_type = #tpu.core_type<tc>, window_params = [{transform_indices = @transform_0, window_bounds = array<i64: 8, 256>}, {transform_indices = @transform_1, window_bounds = array<i64: 8, 2>}]} {
    %c0 = arith.constant 0 : index
    %c0_0 = arith.constant 0 : index
    %0 = vector.load %arg1[%c0, %c0_0] : memref<8x256xf32, #tpu.memory_space<vmem>>, vector<8x256xf32>
    %cst = arith.constant dense<0xFF800000> : vector<8xf32>
    %1 = vector.multi_reduction <maximumf>, %0, %cst [1] : vector<8x256xf32> to vector<8xf32>
    %2 = vector.shape_cast %1 : vector<8xf32> to vector<8x1xf32>
    %cst_1 = arith.constant dense<0.000000e+00> : vector<8xf32>
    %3 = vector.multi_reduction <add>, %0, %cst_1 [1] : vector<8x256xf32> to vector<8xf32>
    %4 = vector.shape_cast %3 : vector<8xf32> to vector<8x1xf32>
    %cst_2 = arith.constant 3.906250e-03 : f32
    %5 = vector.broadcast %cst_2 : f32 to vector<8x1xf32>
    %6 = arith.mulf %4, %5 : vector<8x1xf32>
    %c0_3 = arith.constant 0 : index
    %c0_4 = arith.constant 0 : index
    %7 = vector.load %arg2[%c0_3, %c0_4] : memref<8x2xf32, #tpu.memory_space<vmem>>, vector<8x1xf32>
    tpu.vector_store %arg2[%c0_3, %c0_4], %2 {strides = array<i32>} : memref<8x2xf32, #tpu.memory_space<vmem>>, vector<8x1xf32>,
    %c0_5 = arith.constant 0 : index
    %c1 = arith.constant 1 : index
    %8 = vector.load %arg2[%c0_5, %c1] : memref<8x2xf32, #tpu.memory_space<vmem>>, vector<8x1xf32>
    tpu.vector_store %arg2[%c0_5, %c1], %6 {strides = array<i32>} : memref<8x2xf32, #tpu.memory_space<vmem>>, vector<8x1xf32>,
    return
  }
  func.func @transform_0(%arg0: i32) -> (i32, i32) {
    %c0_i32 = arith.constant 0 : i32
    %c0_i32_0 = arith.constant 0 : i32
    return %arg0, %c0_i32 : i32, i32
  }
  func.func @transform_1(%arg0: i32) -> (i32, i32) {
    %c0_i32 = arith.constant 0 : i32
    %c0_i32_0 = arith.constant 0 : i32
    return %arg0, %c0_i32 : i32, i32
  }
}

</mosaic_0001>

<llo_original>
// kernel: tpu_custom_call.1
$region0: #{tpu_custom_call.1}
  #allocation0 [shape = 'u32[]', space=smem, size = 0x4, offset = 0x4, fixed_abs, tag = 'smem constant byte address 0x4 - core index']
  #allocation1 [shape = 'u32[144,128]{1,0:T(1,128)}', space=vmem, size = 0x12000, scoped, tag = 'internal scratch']
  %s0 = inlined_call_operand.hbm [shape: f32[8,256], index: 0, kind: input, shape index: {}]
  %s1 = inlined_call_operand.vmem [shape: f32[8,2], index: 1, kind: output, shape index: {}]
  %s2 = sld [smem:[#allocation0]]
  $region18: #{tpu_custom_call.1} parent=0
    _
  %s4 = ssub.s32 1, %s2
  %s5 = scalar_select 0, %s4, %s2
  $region1: #{tpu_custom_call.1} parent=0
    #allocation2 [shape = 'u8[8192]{0}', space=vmem, size = 0x2000, scoped, tag = 'input window, operand 0, single buffered']
    #allocation3 [shape = 's32[1]{0}', space=sflag, size = 0x4, scoped, tag = 'scoped memory for tpu_custom_call.1']
    %6 = vsyncpa [#allocation3], 0
    // Predicated region
    $region2: #{tpu_custom_call.1} parent=1 // pred_check
      _
    $region3: #{tpu_custom_call.1} parent=1 // pred_check_branch
      %8 = sbr.rel (0) target = $region5
    $region4: #{tpu_custom_call.1} parent=1 // pred_region
      %s10 = ssub.s32 256, 256
      %11 = vsyncadd [#allocation3], %s10
      %s13 = sshll.u32 [#allocation2], 4
      %s14 = int_to_ptr.vmem [resolvable:$true] %s13
      %16 = dma.hbm_to_vmem [thread:$0]  %s0, 256, %s14, [#allocation3]
    $region5: #{tpu_custom_call.1} parent=1 // pred_fallthru
      _
    // Predicated region
    $region6: #{tpu_custom_call.1} parent=1 // pred_check
      _
    $region7: #{tpu_custom_call.1} parent=1 // pred_check_branch
      %18 = sbr.rel (0) target = $region9
    $region8: #{tpu_custom_call.1} parent=1 // pred_region
      %19 = dma.done [#allocation3], 256
    $region9: #{tpu_custom_call.1} parent=1 // pred_fallthru
      _
    %v20 = vld [vmem:[#allocation2] sm:$0xff]
    %v21 = vld [vmem:[#allocation2 + $0x8] sm:$0xff]
    %v22 = vmax.f32 %v20, %v21
    %23 = vmax.xlane.f32.xlu0 %v22
    %v24 = vpop.xlane.xlu0 %23
    %v25 = vadd.f32 %v20, %v21
    %26 = vadd.xlane.f32.xlu0 %v25
    %v27 = vpop.xlane.xlu0 %26
    %v28 = vmul.f32 %v27, 0.00390625
    %vm29 = vcmask 7168
    %30 = vst.msk [vmem:[%s1] sm:$0xff] %vm29, %v24
    %vm31 = vcmask 15368
    %32 = vst.msk [vmem:[%s1] sm:$0xff] %vm31, %v28
    // Predicated region
    $region10: #{tpu_custom_call.1} parent=1 // pred_check
      _
    $region11: #{tpu_custom_call.1} parent=1 // pred_check_branch
      %34 = sbr.rel (0) target = $region13
    $region12: #{tpu_custom_call.1} parent=1 // pred_region
      _
    $region13: #{tpu_custom_call.1} parent=1 // pred_fallthru
      _
    // Predicated region
    $region14: #{tpu_custom_call.1} parent=1 // pred_check
      _
    $region15: #{tpu_custom_call.1} parent=1 // pred_check_branch
      %36 = sbr.rel (0) target = $region17
    $region16: #{tpu_custom_call.1} parent=1 // pred_region
      _
    $region17: #{tpu_custom_call.1} parent=1 // pred_fallthru
      _
    %37 = vsyncpa [#allocation3], 1

</llo_original>
